<compile_context>
chip_gen: v7x
topology: tpu7x:2x2x1
jax: 0.10.0
libtpu: 0.0.40
codegen_flags: <defaults>
</compile_context>

<pallas_src>
import functools

import jax
import jax.numpy as jnp
from jax import lax
from jax.experimental import pallas as pl
from jax.experimental.pallas import tpu as pltpu


def _channel_attention_kernel(x_ref, w1_ref, w2_ref, o_ref, sum_acc, max_acc,
                              *, inv_hw, hw, spatial_tile, lane, needs_mask):
    """Grid = (row_block r [parallel], spatial tile s [arbitrary/reduction])."""
    si = pl.program_id(1)

    @pl.when(si == 0)
    def _init():
        sum_acc[...] = jnp.zeros(sum_acc.shape, sum_acc.dtype)
        max_acc[...] = jnp.full(max_acc.shape, -jnp.inf, max_acc.dtype)

    # Hot loop: per 128-lane group, loads + elementwise add/max (VPU only) into
    # lane-shaped accumulators.  Cross-lane reduction is deferred to finalize so
    # the streaming steps stay hidden under the HBM transfer.
    n_groups = spatial_tile // lane
    for g in range(n_groups):
        xg = x_ref[:, :, g * lane:(g + 1) * lane].astype(jnp.float32)  # (Nb,C,lane)
        if needs_mask:
            base = si * spatial_tile + g * lane
            idx = base + lax.broadcasted_iota(jnp.int32, xg.shape, 2)
            valid = idx < hw
            xs = jnp.where(valid, xg, 0.0)       # pad -> 0 for the sum path
            xm = jnp.where(valid, xg, -jnp.inf)  # pad -> -inf for the max path
        else:
            xs = xg
            xm = xg
        sum_acc[...] += xs
        max_acc[...] = jnp.maximum(max_acc[...], xm)

    @pl.when(si == pl.num_programs(1) - 1)
    def _finalize():
        w1 = w1_ref[...].astype(jnp.float32)                    # (C, Ch)
        w2 = w2_ref[...].astype(jnp.float32)                    # (Ch, C)
        avg = jnp.sum(sum_acc[...], axis=-1) * inv_hw           # (Nb, C)
        mx = jnp.max(max_acc[...], axis=-1)                     # (Nb, C)

        # Shared MLP (two tiny MXU matmuls); runs once per row block, off the
        # critical path, so it is kept as two calls for lowering robustness.
        def mlp(v):
            h = jnp.dot(v, w1, preferred_element_type=jnp.float32)   # (Nb, Ch)
            h = jnp.maximum(h, 0.0)                                  # ReLU
            return jnp.dot(h, w2, preferred_element_type=jnp.float32)  # (Nb, C)

        logits = mlp(avg) + mlp(mx)
        gate = 1.0 / (1.0 + jnp.exp(-logits))                   # sigmoid
        o_ref[...] = gate.astype(o_ref.dtype)


def _vmem_capacity_bytes():
    """Generation-aware VMEM capacity (v5e/v6e: 128 MiB, v7x: 64 MiB)."""
    try:
        return int(pltpu.get_tpu_info().vmem_capacity_bytes)
    except Exception:
        return 64 << 20  # conservative fallback (v7x-sized VMEM)


def _pick_row_block(n, c, itemsize, budget):
    """Batch row-block Nb with N % Nb == 0 and (Nb % 8 == 0 or Nb == N) (so the
    (Nb, C) output block satisfies the sublane constraint).  Prefers a 2-way
    split so v7x's two TensorCores each take half the stream; bounds Nb so the
    minimum (Nb, C, 128) input buffer fits the per-buffer budget."""
    def ok(nb):
        return n % nb == 0 and (nb % 8 == 0 or nb == n)

    def fits(nb):
        return nb * c * 128 * itemsize <= budget

    half = n // 2
    if n % 2 == 0 and ok(half) and fits(half):
        return half
    if fits(n):
        return n
    legal = [nb for nb in range(8, n, 8) if ok(nb)]
    fitting = [nb for nb in legal if fits(nb)]
    if fitting:
        return max(fitting)
    if legal:
        return min(legal)
    # TODO(synk): for huge C (even an (N=1-row, C, 128) block over budget), also
    # tile C for the pooling pass and run the MLP outside the kernel.
    return n


def _pick_spatial_tile(nb, c, hw, itemsize, budget):
    """Largest lane-aligned (multiple of 128) spatial tile within the per-buffer
    budget.  Prefers a tile that divides H*W (no masked tail) unless that would
    shrink the tile by more than 2x.  Returns (tile, needs_mask)."""
    if hw <= 128:
        return hw, False                      # full-extent block, no mask needed
    per_col = max(1, nb * c * itemsize)
    max_st = max(128, (budget // per_col) // 128 * 128)
    hw_floor = (hw // 128) * 128
    st = min(hw_floor, max_st)
    if hw % 128 == 0:
        d = st
        while d >= 128 and hw % d != 0:
            d -= 128
        if d >= 128 and d * 2 >= st:
            return d, False
    return st, (hw % st) != 0


def channel_attention(x, w1_conv, w2_conv, *, spatial_tile=None, row_block=None):
    """Equivalent of ChannelAttention.forward.

    x:       (N, C, H, W)
    w1_conv: (C // ratio, C, 1, 1)  first 1x1 conv weight (no bias)
    w2_conv: (C, C // ratio, 1, 1)  second 1x1 conv weight (no bias)
    returns  (N, C, 1, 1) sigmoid gate, same dtype as x.
    """
    N, C, H, W = x.shape
    HW = H * W
    Ch = w1_conv.shape[0]

    # 1x1 convolutions on a (N, C, 1, 1) tensor are matmuls on (N, C).
    w1 = jnp.transpose(w1_conv.reshape(Ch, C))    # (C, Ch): v @ w1
    w2 = jnp.transpose(w2_conv.reshape(C, Ch))    # (Ch, C): h @ w2

    # Lane-dense layout for the pooling reduction: spatial on the lane axis.
    x3 = x.reshape(N, C, HW)

    # Generation-aware VMEM budgeting; set the scoped limit explicitly so v5e's
    # 16 MiB default never binds and v7x can use large slabs of its 64 MiB.
    vmem_cap = _vmem_capacity_bytes()
    vmem_limit = vmem_cap * 3 // 4                # leave 25% headroom
    buf_budget = vmem_limit // 4                  # 2 double-buffered input buffers = 1/2

    nb = row_block if row_block is not None else _pick_row_block(
        N, C, x.dtype.itemsize, buf_budget)
    assert N % nb == 0 and (nb % 8 == 0 or nb == N), (N, nb)

    if spatial_tile is None:
        st, needs_mask = _pick_spatial_tile(nb, C, HW, x.dtype.itemsize, buf_budget)
    else:
        st = int(spatial_tile)
        assert st <= HW and (st % 128 == 0 or st == HW), (HW, st)
        needs_mask = (HW % st) != 0
    lane = 128 if st >= 128 else st

    grid = (N // nb, pl.cdiv(HW, st))

    kernel = functools.partial(
        _channel_attention_kernel, inv_hw=1.0 / float(HW), hw=HW,
        spatial_tile=st, lane=lane, needs_mask=needs_mask)

    out = pl.pallas_call(
        kernel,
        out_shape=jax.ShapeDtypeStruct((N, C), x.dtype),
        grid_spec=pltpu.PrefetchScalarGridSpec(
            num_scalar_prefetch=0,
            grid=grid,
            in_specs=[
                pl.BlockSpec((nb, C, st), lambda r, s: (r, 0, s)),   # spatial slab
                pl.BlockSpec((C, Ch), lambda r, s: (0, 0)),          # resident weights
                pl.BlockSpec((Ch, C), lambda r, s: (0, 0)),
            ],
            out_specs=pl.BlockSpec((nb, C), lambda r, s: (r, 0)),
            scratch_shapes=[
                pltpu.VMEM((nb, C, lane), jnp.float32),   # lane-shaped running sum
                pltpu.VMEM((nb, C, lane), jnp.float32),   # lane-shaped running max
            ],
        ),
        compiler_params=pltpu.CompilerParams(
            dimension_semantics=("parallel", "arbitrary"),
            vmem_limit_bytes=int(vmem_limit),
        ),
    )(x3, w1, w2)

    return out.reshape(N, C, 1, 1)


def channel_attention_ref(x, w1_conv, w2_conv):
    """Pure-JAX reference with the same semantics as the PyTorch module."""
    N, C, H, W = x.shape
    Ch = w1_conv.shape[0]
    w1 = w1_conv.reshape(Ch, C)
    w2 = w2_conv.reshape(C, Ch)
    xf = x.astype(jnp.float32)
    avg = jnp.mean(xf, axis=(2, 3))                          # (N, C)
    mx = jnp.max(xf, axis=(2, 3))                            # (N, C)

    def mlp(v):
        h = jnp.maximum(v @ w1.T, 0.0)
        return h @ w2.T

    logits = mlp(avg) + mlp(mx)
    gate = 1.0 / (1.0 + jnp.exp(-logits))
    return gate.astype(x.dtype).reshape(N, C, 1, 1)


if __name__ == "__main__":
    key = jax.random.PRNGKey(0)
    k1, k2, k3, k4 = jax.random.split(key, 4)

    # ratio=16 requires C >= 16; use a small but valid configuration.
    N, C, ratio = 2, 64, 16
    Ch = C // ratio

    w1_conv = 0.1 * jax.random.normal(k2, (Ch, C, 1, 1), dtype=jnp.float32)
    w2_conv = 0.1 * jax.random.normal(k3, (C, Ch, 1, 1), dtype=jnp.float32)

    # Case 1: 16x16 spatial (H*W = 256, lane-aligned), auto tiling (single slab).
    x = jax.random.normal(k1, (N, C, 16, 16), dtype=jnp.float32)
    y = channel_attention(x, w1_conv, w2_conv)
    jax.block_until_ready(y)
    ref = channel_attention_ref(x, w1_conv, w2_conv)
    assert y.shape == (N, C, 1, 1), y.shape
    assert y.dtype == x.dtype
    assert jnp.allclose(y, ref, atol=1e-4, rtol=1e-4), float(jnp.max(jnp.abs(y - ref)))

    # Case 2: forced 128-wide tiles -> multi-step accumulator (reduction) path.
    y2 = channel_attention(x, w1_conv, w2_conv, spatial_tile=128)
    jax.block_until_ready(y2)
    assert jnp.allclose(y2, ref, atol=1e-4, rtol=1e-4), float(jnp.max(jnp.abs(y2 - ref)))

    # Case 3: 15x15 spatial (H*W = 225, not a multiple of 128) -> masked tail path.
    xb = jax.random.normal(k4, (N, C, 15, 15), dtype=jnp.float32)
    y3 = channel_attention(xb, w1_conv, w2_conv)
    jax.block_until_ready(y3)
    ref3 = channel_attention_ref(xb, w1_conv, w2_conv)
    assert jnp.allclose(y3, ref3, atol=1e-4, rtol=1e-4), float(
        jnp.max(jnp.abs(y3 - ref3)))

    print("KERNEL_OK")
</pallas_src>

<mosaic_0001>
module attributes {stable_mosaic.version = 11 : i64} {
  func.func @_channel_attention_kernel(%arg0: i32, %arg1: i32, %arg2: memref<2x64x256xf32, #tpu.memory_space<vmem>>, %arg3: memref<64x4xf32, #tpu.memory_space<vmem>>, %arg4: memref<4x64xf32, #tpu.memory_space<vmem>>, %arg5: memref<2x64xf32, #tpu.memory_space<vmem>>, %arg6: memref<2x64x128xf32, #tpu.memory_space<vmem>>, %arg7: memref<2x64x128xf32, #tpu.memory_space<vmem>>) attributes {dimension_semantics = [#tpu.dimension_semantics<parallel>, #tpu.dimension_semantics<arbitrary>], iteration_bounds = array<i64: 1, 1>, scalar_prefetch = 0 : i64, scratch_operands = 2 : i64, tpu.core_type = #tpu.core_type<tc>, window_params = [{transform_indices = @transform_0, window_bounds = array<i64: 2, 64, 256>}, {pipeline_mode = #tpu.pipeline_mode<synchronous>, transform_indices = @transform_1, window_bounds = array<i64: 64, 4>}, {pipeline_mode = #tpu.pipeline_mode<synchronous>, transform_indices = @transform_2, window_bounds = array<i64: 4, 64>}, {transform_indices = @transform_3, window_bounds = array<i64: 2, 64>}]} {
    %c0_i32 = arith.constant 0 : i32
    %0 = arith.cmpi eq, %arg1, %c0_i32 : i32
    %1 = arith.extui %0 : i1 to i32
    %c0_i32_0 = arith.constant 0 : i32
    %2 = arith.cmpi ne, %1, %c0_i32_0 : i32
    scf.if %2 {
      %cst = arith.constant 0.000000e+00 : f32
      %20 = vector.broadcast %cst : f32 to vector<2x64x128xf32>
      %c0_31 = arith.constant 0 : index
      %c0_32 = arith.constant 0 : index
      %c0_33 = arith.constant 0 : index
      %21 = vector.load %arg6[%c0_31, %c0_32, %c0_33] : memref<2x64x128xf32, #tpu.memory_space<vmem>>, vector<2x64x128xf32>
      tpu.vector_store %arg6[%c0_31, %c0_32, %c0_33], %20 {strides = array<i32>} : memref<2x64x128xf32, #tpu.memory_space<vmem>>, vector<2x64x128xf32>,
      %cst_34 = arith.constant 0xFF800000 : f32
      %22 = vector.broadcast %cst_34 : f32 to vector<2x64x128xf32>
      %c0_35 = arith.constant 0 : index
      %c0_36 = arith.constant 0 : index
      %c0_37 = arith.constant 0 : index
      %23 = vector.load %arg7[%c0_35, %c0_36, %c0_37] : memref<2x64x128xf32, #tpu.memory_space<vmem>>, vector<2x64x128xf32>
      tpu.vector_store %arg7[%c0_35, %c0_36, %c0_37], %22 {strides = array<i32>} : memref<2x64x128xf32, #tpu.memory_space<vmem>>, vector<2x64x128xf32>,
    } else {
    }
    %c0 = arith.constant 0 : index
    %c0_1 = arith.constant 0 : index
    %c0_2 = arith.constant 0 : index
    %3 = vector.load %arg2[%c0, %c0_1, %c0_2] : memref<2x64x256xf32, #tpu.memory_space<vmem>>, vector<2x64x128xf32>
    %c0_3 = arith.constant 0 : index
    %c0_4 = arith.constant 0 : index
    %c0_5 = arith.constant 0 : index
    %4 = vector.load %arg6[%c0_3, %c0_4, %c0_5] : memref<2x64x128xf32, #tpu.memory_space<vmem>>, vector<2x64x128xf32>
    %5 = arith.addf %4, %3 : vector<2x64x128xf32>
    %c0_6 = arith.constant 0 : index
    %c0_7 = arith.constant 0 : index
    %c0_8 = arith.constant 0 : index
    %6 = vector.load %arg6[%c0_6, %c0_7, %c0_8] : memref<2x64x128xf32, #tpu.memory_space<vmem>>, vector<2x64x128xf32>
    tpu.vector_store %arg6[%c0_6, %c0_7, %c0_8], %5 {strides = array<i32>} : memref<2x64x128xf32, #tpu.memory_space<vmem>>, vector<2x64x128xf32>,
    %c0_9 = arith.constant 0 : index
    %c0_10 = arith.constant 0 : index
    %c0_11 = arith.constant 0 : index
    %7 = vector.load %arg7[%c0_9, %c0_10, %c0_11] : memref<2x64x128xf32, #tpu.memory_space<vmem>>, vector<2x64x128xf32>
    %8 = arith.maximumf %7, %3 : vector<2x64x128xf32>
    %c0_12 = arith.constant 0 : index
    %c0_13 = arith.constant 0 : index
    %c0_14 = arith.constant 0 : index
    %9 = vector.load %arg7[%c0_12, %c0_13, %c0_14] : memref<2x64x128xf32, #tpu.memory_space<vmem>>, vector<2x64x128xf32>
    tpu.vector_store %arg7[%c0_12, %c0_13, %c0_14], %8 {strides = array<i32>} : memref<2x64x128xf32, #tpu.memory_space<vmem>>, vector<2x64x128xf32>,
    %c0_15 = arith.constant 0 : index
    %c0_16 = arith.constant 0 : index
    %c128 = arith.constant 128 : index
    %10 = vector.load %arg2[%c0_15, %c0_16, %c128] : memref<2x64x256xf32, #tpu.memory_space<vmem>>, vector<2x64x128xf32>
    %c0_17 = arith.constant 0 : index
    %c0_18 = arith.constant 0 : index
    %c0_19 = arith.constant 0 : index
    %11 = vector.load %arg6[%c0_17, %c0_18, %c0_19] : memref<2x64x128xf32, #tpu.memory_space<vmem>>, vector<2x64x128xf32>
    %12 = arith.addf %11, %10 : vector<2x64x128xf32>
    %c0_20 = arith.constant 0 : index
    %c0_21 = arith.constant 0 : index
    %c0_22 = arith.constant 0 : index
    %13 = vector.load %arg6[%c0_20, %c0_21, %c0_22] : memref<2x64x128xf32, #tpu.memory_space<vmem>>, vector<2x64x128xf32>
    tpu.vector_store %arg6[%c0_20, %c0_21, %c0_22], %12 {strides = array<i32>} : memref<2x64x128xf32, #tpu.memory_space<vmem>>, vector<2x64x128xf32>,
    %c0_23 = arith.constant 0 : index
    %c0_24 = arith.constant 0 : index
    %c0_25 = arith.constant 0 : index
    %14 = vector.load %arg7[%c0_23, %c0_24, %c0_25] : memref<2x64x128xf32, #tpu.memory_space<vmem>>, vector<2x64x128xf32>
    %15 = arith.maximumf %14, %10 : vector<2x64x128xf32>
    %c0_26 = arith.constant 0 : index
    %c0_27 = arith.constant 0 : index
    %c0_28 = arith.constant 0 : index
    %16 = vector.load %arg7[%c0_26, %c0_27, %c0_28] : memref<2x64x128xf32, #tpu.memory_space<vmem>>, vector<2x64x128xf32>
    tpu.vector_store %arg7[%c0_26, %c0_27, %c0_28], %15 {strides = array<i32>} : memref<2x64x128xf32, #tpu.memory_space<vmem>>, vector<2x64x128xf32>,
    %c0_i32_29 = arith.constant 0 : i32
    %17 = arith.cmpi eq, %arg1, %c0_i32_29 : i32
    %18 = arith.extui %17 : i1 to i32
    %c0_i32_30 = arith.constant 0 : i32
    %19 = arith.cmpi ne, %18, %c0_i32_30 : i32
    scf.if %19 {
      %c0_31 = arith.constant 0 : index
      %c0_32 = arith.constant 0 : index
      %20 = vector.load %arg3[%c0_31, %c0_32] : memref<64x4xf32, #tpu.memory_space<vmem>>, vector<64x4xf32>
      %c0_33 = arith.constant 0 : index
      %c0_34 = arith.constant 0 : index
      %21 = vector.load %arg4[%c0_33, %c0_34] : memref<4x64xf32, #tpu.memory_space<vmem>>, vector<4x64xf32>
      %c0_35 = arith.constant 0 : index
      %c0_36 = arith.constant 0 : index
      %c0_37 = arith.constant 0 : index
      %22 = vector.load %arg6[%c0_35, %c0_36, %c0_37] : memref<2x64x128xf32, #tpu.memory_space<vmem>>, vector<2x64x128xf32>
      %cst = arith.constant dense<0.000000e+00> : vector<2x64xf32>
      %23 = vector.multi_reduction <add>, %22, %cst [2] : vector<2x64x128xf32> to vector<2x64xf32>
      %cst_38 = arith.constant 3.906250e-03 : f32
      %24 = vector.broadcast %cst_38 : f32 to vector<2x64xf32>
      %25 = arith.mulf %23, %24 : vector<2x64xf32>
      %c0_39 = arith.constant 0 : index
      %c0_40 = arith.constant 0 : index
      %c0_41 = arith.constant 0 : index
      %26 = vector.load %arg7[%c0_39, %c0_40, %c0_41] : memref<2x64x128xf32, #tpu.memory_space<vmem>>, vector<2x64x128xf32>
      %cst_42 = arith.constant dense<0xFF800000> : vector<2x64xf32>
      %27 = vector.multi_reduction <maximumf>, %26, %cst_42 [2] : vector<2x64x128xf32> to vector<2x64xf32>
      %cst_43 = arith.constant dense<0.000000e+00> : vector<2x4xf32>
      %28 = tpu.matmul %25, %20, %cst_43 {dimension_numbers = #tpu.dot_dimension_numbers<[1], [0], [0], [1], [0, 0, 1, 1], [], []>} : vector<2x64xf32>, vector<64x4xf32>, vector<2x4xf32> -> vector<2x4xf32>
      %cst_44 = arith.constant 0.000000e+00 : f32
      %29 = vector.broadcast %cst_44 : f32 to vector<2x4xf32>
      %30 = arith.maximumf %28, %29 : vector<2x4xf32>
      %cst_45 = arith.constant dense<0.000000e+00> : vector<2x64xf32>
      %31 = tpu.matmul %30, %21, %cst_45 {dimension_numbers = #tpu.dot_dimension_numbers<[1], [0], [0], [1], [0, 0, 1, 1], [], []>} : vector<2x4xf32>, vector<4x64xf32>, vector<2x64xf32> -> vector<2x64xf32>
      %cst_46 = arith.constant dense<0.000000e+00> : vector<2x4xf32>
      %32 = tpu.matmul %27, %20, %cst_46 {dimension_numbers = #tpu.dot_dimension_numbers<[1], [0], [0], [1], [0, 0, 1, 1], [], []>} : vector<2x64xf32>, vector<64x4xf32>, vector<2x4xf32> -> vector<2x4xf32>
      %cst_47 = arith.constant 0.000000e+00 : f32
      %33 = vector.broadcast %cst_47 : f32 to vector<2x4xf32>
      %34 = arith.maximumf %32, %33 : vector<2x4xf32>
      %cst_48 = arith.constant dense<0.000000e+00> : vector<2x64xf32>
      %35 = tpu.matmul %34, %21, %cst_48 {dimension_numbers = #tpu.dot_dimension_numbers<[1], [0], [0], [1], [0, 0, 1, 1], [], []>} : vector<2x4xf32>, vector<4x64xf32>, vector<2x64xf32> -> vector<2x64xf32>
      %36 = arith.addf %31, %35 : vector<2x64xf32>
      %cst_49 = arith.constant 0.000000e+00 : f32
      %37 = vector.broadcast %cst_49 : f32 to vector<2x64xf32>
      %38 = arith.subf %37, %36 : vector<2x64xf32>
      %39 = math.exp %38 : vector<2x64xf32>
      %cst_50 = arith.constant 1.000000e+00 : f32
      %40 = vector.broadcast %cst_50 : f32 to vector<2x64xf32>
      %41 = arith.addf %40, %39 : vector<2x64xf32>
      %cst_51 = arith.constant 1.000000e+00 : f32
      %42 = vector.broadcast %cst_51 : f32 to vector<2x64xf32>
      %43 = arith.divf %42, %41 : vector<2x64xf32>
      %c0_52 = arith.constant 0 : index
      %c0_53 = arith.constant 0 : index
      %44 = vector.load %arg5[%c0_52, %c0_53] : memref<2x64xf32, #tpu.memory_space<vmem>>, vector<2x64xf32>
      tpu.vector_store %arg5[%c0_52, %c0_53], %43 {strides = array<i32>} : memref<2x64xf32, #tpu.memory_space<vmem>>, vector<2x64xf32>,
    } else {
    }
    return
  }
  func.func @transform_0(%arg0: i32, %arg1: i32) -> (i32, i32, i32) {
    %c0_i32 = arith.constant 0 : i32
    %c0_i32_0 = arith.constant 0 : i32
    return %arg0, %c0_i32, %arg1 : i32, i32, i32
  }
  func.func @transform_1(%arg0: i32, %arg1: i32) -> (i32, i32) {
    %c0_i32 = arith.constant 0 : i32
    %c0_i32_0 = arith.constant 0 : i32
    %c0_i32_1 = arith.constant 0 : i32
    return %c0_i32, %c0_i32_0 : i32, i32
  }
  func.func @transform_2(%arg0: i32, %arg1: i32) -> (i32, i32) {
    %c0_i32 = arith.constant 0 : i32
    %c0_i32_0 = arith.constant 0 : i32
    %c0_i32_1 = arith.constant 0 : i32
    return %c0_i32, %c0_i32_0 : i32, i32
  }
  func.func @transform_3(%arg0: i32, %arg1: i32) -> (i32, i32) {
    %c0_i32 = arith.constant 0 : i32
    %c0_i32_0 = arith.constant 0 : i32
    return %arg0, %c0_i32 : i32, i32
  }
}

</mosaic_0001>

<llo_original>
// kernel: tpu_custom_call.1
$region0: #{tpu_custom_call.1}
  #allocation0 [shape = 'u32[]', space=smem, size = 0x4, offset = 0x4, fixed_abs, tag = 'smem constant byte address 0x4 - core index']
  #allocation1 [shape = 'u32[144,128]{1,0:T(1,128)}', space=vmem, size = 0x12000, scoped, tag = 'internal scratch']
  #allocation2 [shape = 'f32[2,64,128]{2,1,0:T(8,128)}', space=vmem, size = 0x10000, scoped, tag = 'scratch operand']
  #allocation3 [shape = 'f32[2,64,128]{2,1,0:T(8,128)}', space=vmem, size = 0x10000, scoped, tag = 'scratch operand']
  %s0 = inlined_call_operand.hbm [shape: f32[2,64,256], index: 0, kind: input, shape index: {}]
  %s1 = inlined_call_operand.vmem [shape: f32[64,4], index: 1, kind: input, shape index: {}]
  %s2 = inlined_call_operand.vmem [shape: f32[4,64], index: 2, kind: input, shape index: {}]
  %s3 = inlined_call_operand.hbm [shape: f32[2,64], index: 3, kind: output, shape index: {}]
  %s4 = sld [smem:[#allocation0]]
  $region34: #{tpu_custom_call.1} parent=0
    _
  %s6 = ssub.s32 1, %s4
  %s7 = scalar_select 0, %s6, %s4
  $region1: #{tpu_custom_call.1} parent=0
    #allocation4 [shape = 'u8[131072]{0}', space=vmem, size = 0x20000, scoped, tag = 'input window, operand 0, single buffered']
    #allocation5 [shape = 's32[1]{0}', space=sflag, size = 0x4, scoped, tag = 'scoped memory for tpu_custom_call.1']
    #allocation6 [shape = 's32[1]{0}', space=sflag, size = 0x4, scoped, tag = 'scoped memory for tpu_custom_call.1']
    #allocation7 [shape = 'u8[1024]{0}', space=vmem, size = 0x400, scoped, tag = 'output window, operand 0, single buffered']
    %8 = vsyncpa [#allocation5], 0
    %9 = vsyncpa [#allocation6], 0
    // Predicated region
    $region2: #{tpu_custom_call.1} parent=1 // pred_check
      _
    $region3: #{tpu_custom_call.1} parent=1 // pred_check_branch
      %11 = sbr.rel (0) target = $region5
    $region4: #{tpu_custom_call.1} parent=1 // pred_region
      %s13 = ssub.s32 4096, 4096
      %14 = vsyncadd [#allocation5], %s13
      %s15 = sshll.u32 [#allocation4], 4
      %s16 = int_to_ptr.vmem [resolvable:$true] %s15
      %21 = dma.hbm_to_vmem [thread:$0]  %s0, 4096, %s16, [#allocation5], 256, 256, 16
    $region5: #{tpu_custom_call.1} parent=1 // pred_fallthru
      _
    // Predicated region
    $region6: #{tpu_custom_call.1} parent=1 // pred_check
      _
    $region7: #{tpu_custom_call.1} parent=1 // pred_check_branch
      %23 = sbr.rel (0) target = $region9
    $region8: #{tpu_custom_call.1} parent=1 // pred_region
      _
    $region9: #{tpu_custom_call.1} parent=1 // pred_fallthru
      _
    // Predicated region
    $region10: #{tpu_custom_call.1} parent=1 // pred_check
      _
    $region11: #{tpu_custom_call.1} parent=1 // pred_check_branch
      %25 = sbr.rel (0) target = $region13
    $region12: #{tpu_custom_call.1} parent=1 // pred_region
      _
    $region13: #{tpu_custom_call.1} parent=1 // pred_fallthru
      _
    // Predicated region
    $region14: #{tpu_custom_call.1} parent=1 // pred_check
      _
    $region15: #{tpu_custom_call.1} parent=1 // pred_check_branch
      %27 = sbr.rel (0) target = $region17
    $region16: #{tpu_custom_call.1} parent=1 // pred_region
      %28 = dma.done [#allocation5], 4096
    $region17: #{tpu_custom_call.1} parent=1 // pred_fallthru
      _
    %p29 = scmp.eq.s32.totalorder 0, 0
    // Predicated region
    $region18: #{tpu_custom_call.1} parent=1 // pred_check
      %p30 = pneg %p29
    $region19: #{tpu_custom_call.1} parent=1 // pred_check_branch
      %32 = sbr.rel (%p30) target = $region21
    $region20: #{tpu_custom_call.1} parent=1 // pred_region
      %33 = vst [vmem:[#allocation2] sm:$0xff] 0.0
      %34 = vst [vmem:[#allocation2 + $0x8] sm:$0xff] 0.0
      %35 = vst [vmem:[#allocation2 + $0x10] sm:$0xff] 0.0
      %36 = vst [vmem:[#allocation2 + $0x18] sm:$0xff] 0.0
      %37 = vst [vmem:[#allocation2 + $0x20] sm:$0xff] 0.0
      %38 = vst [vmem:[#allocation2 + $0x28] sm:$0xff] 0.0
      %39 = vst [vmem:[#allocation2 + $0x30] sm:$0xff] 0.0
      %40 = vst [vmem:[#allocation2 + $0x38] sm:$0xff] 0.0
      %41 = vst [vmem:[#allocation2 + $0x40] sm:$0xff] 0.0
      %42 = vst [vmem:[#allocation2 + $0x48] sm:$0xff] 0.0
      %43 = vst [vmem:[#allocation2 + $0x50] sm:$0xff] 0.0
      %44 = vst [vmem:[#allocation2 + $0x58] sm:$0xff] 0.0
      %45 = vst [vmem:[#allocation2 + $0x60] sm:$0xff] 0.0
      %46 = vst [vmem:[#allocation2 + $0x68] sm:$0xff] 0.0
      %47 = vst [vmem:[#allocation2 + $0x70] sm:$0xff] 0.0
      %48 = vst [vmem:[#allocation2 + $0x78] sm:$0xff] 0.0
      %49 = vst [vmem:[#allocation3] sm:$0xff] -inf
      %50 = vst [vmem:[#allocation3 + $0x8] sm:$0xff] -inf
      %51 = vst [vmem:[#allocation3 + $0x10] sm:$0xff] -inf
      %52 = vst [vmem:[#allocation3 + $0x18] sm:$0xff] -inf
      %53 = vst [vmem:[#allocation3 + $0x20] sm:$0xff] -inf
      %54 = vst [vmem:[#allocation3 + $0x28] sm:$0xff] -inf
      %55 = vst [vmem:[#allocation3 + $0x30] sm:$0xff] -inf
      %56 = vst [vmem:[#allocation3 + $0x38] sm:$0xff] -inf
      %57 = vst [vmem:[#allocation3 + $0x40] sm:$0xff] -inf
      %58 = vst [vmem:[#allocation3 + $0x48] sm:$0xff] -inf
      %59 = vst [vmem:[#allocation3 + $0x50] sm:$0xff] -inf
      %60 = vst [vmem:[#allocation3 + $0x58] sm:$0xff] -inf
      %61 = vst [vmem:[#allocation3 + $0x60] sm:$0xff] -inf
      %62 = vst [vmem:[#allocation3 + $0x68] sm:$0xff] -inf
      %63 = vst [vmem:[#allocation3 + $0x70] sm:$0xff] -inf
      %64 = vst [vmem:[#allocation3 + $0x78] sm:$0xff] -inf
    $region21: #{tpu_custom_call.1} parent=1 // pred_fallthru
      _
    %v65 = vld [vmem:[#allocation4] sm:$0xff]
    %v66 = vld [vmem:[#allocation4 + $0x10] sm:$0xff]
    %v67 = vld [vmem:[#allocation4 + $0x20] sm:$0xff]
    %v68 = vld [vmem:[#allocation4 + $0x30] sm:$0xff]
    %v69 = vld [vmem:[#allocation4 + $0x40] sm:$0xff]
    %v70 = vld [vmem:[#allocation4 + $0x50] sm:$0xff]
    %v71 = vld [vmem:[#allocation4 + $0x60] sm:$0xff]
    %v72 = vld [vmem:[#allocation4 + $0x70] sm:$0xff]
    %v73 = vld [vmem:[#allocation4 + $0x80] sm:$0xff]
    %v74 = vld [vmem:[#allocation4 + $0x90] sm:$0xff]
    %v75 = vld [vmem:[#allocation4 + $0xa0] sm:$0xff]
    %v76 = vld [vmem:[#allocation4 + $0xb0] sm:$0xff]
    %v77 = vld [vmem:[#allocation4 + $0xc0] sm:$0xff]
    %v78 = vld [vmem:[#allocation4 + $0xd0] sm:$0xff]
    %v79 = vld [vmem:[#allocation4 + $0xe0] sm:$0xff]
    %v80 = vld [vmem:[#allocation4 + $0xf0] sm:$0xff]
    %v81 = vld [vmem:[#allocation2] sm:$0xff]
    %v82 = vld [vmem:[#allocation2 + $0x8] sm:$0xff]
    %v83 = vld [vmem:[#allocation2 + $0x10] sm:$0xff]
    %v84 = vld [vmem:[#allocation2 + $0x18] sm:$0xff]
    %v85 = vld [vmem:[#allocation2 + $0x20] sm:$0xff]
    %v86 = vld [vmem:[#allocation2 + $0x28] sm:$0xff]
    %v87 = vld [vmem:[#allocation2 + $0x30] sm:$0xff]
    %v88 = vld [vmem:[#allocation2 + $0x38] sm:$0xff]
    %v89 = vld [vmem:[#allocation2 + $0x40] sm:$0xff]
    %v90 = vld [vmem:[#allocation2 + $0x48] sm:$0xff]
    %v91 = vld [vmem:[#allocation2 + $0x50] sm:$0xff]
    %v92 = vld [vmem:[#allocation2 + $0x58] sm:$0xff]
    %v93 = vld [vmem:[#allocation2 + $0x60] sm:$0xff]
    %v94 = vld [vmem:[#allocation2 + $0x68] sm:$0xff]
    %v95 = vld [vmem:[#allocation2 + $0x70] sm:$0xff]
    %v96 = vld [vmem:[#allocation2 + $0x78] sm:$0xff]
    %v97 = vadd.f32 %v81, %v65
    %v98 = vadd.f32 %v82, %v66
    %v99 = vadd.f32 %v83, %v67
    %v100 = vadd.f32 %v84, %v68
    %v101 = vadd.f32 %v85, %v69
    %v102 = vadd.f32 %v86, %v70
    %v103 = vadd.f32 %v87, %v71
    %v104 = vadd.f32 %v88, %v72
    %v105 = vadd.f32 %v89, %v73
    %v106 = vadd.f32 %v90, %v74
    %v107 = vadd.f32 %v91, %v75
    %v108 = vadd.f32 %v92, %v76
    %v109 = vadd.f32 %v93, %v77
    %v110 = vadd.f32 %v94, %v78
    %v111 = vadd.f32 %v95, %v79
    %v112 = vadd.f32 %v96, %v80
    %113 = vst [vmem:[#allocation2] sm:$0xff] %v97
    %114 = vst [vmem:[#allocation2 + $0x8] sm:$0xff] %v98
    %115 = vst [vmem:[#allocation2 + $0x10] sm:$0xff] %v99
    %116 = vst [vmem:[#allocation2 + $0x18] sm:$0xff] %v100
    %117 = vst [vmem:[#allocation2 + $0x20] sm:$0xff] %v101
    %118 = vst [vmem:[#allocation2 + $0x28] sm:$0xff] %v102
    %119 = vst [vmem:[#allocation2 + $0x30] sm:$0xff] %v103
    %120 = vst [vmem:[#allocation2 + $0x38] sm:$0xff] %v104
    %121 = vst [vmem:[#allocation2 + $0x40] sm:$0xff] %v105
    %122 = vst [vmem:[#allocation2 + $0x48] sm:$0xff] %v106
    %123 = vst [vmem:[#allocation2 + $0x50] sm:$0xff] %v107
    %124 = vst [vmem:[#allocation2 + $0x58] sm:$0xff] %v108
    %125 = vst [vmem:[#allocation2 + $0x60] sm:$0xff] %v109
    %126 = vst [vmem:[#allocation2 + $0x68] sm:$0xff] %v110
    %127 = vst [vmem:[#allocation2 + $0x70] sm:$0xff] %v111
    %128 = vst [vmem:[#allocation2 + $0x78] sm:$0xff] %v112
    %v129 = vld [vmem:[#allocation3] sm:$0xff]
    %v130 = vld [vmem:[#allocation3 + $0x8] sm:$0xff]
    %v131 = vld [vmem:[#allocation3 + $0x10] sm:$0xff]
    %v132 = vld [vmem:[#allocation3 + $0x18] sm:$0xff]
    %v133 = vld [vmem:[#allocation3 + $0x20] sm:$0xff]
    %v134 = vld [vmem:[#allocation3 + $0x28] sm:$0xff]
    %v135 = vld [vmem:[#allocation3 + $0x30] sm:$0xff]
    %v136 = vld [vmem:[#allocation3 + $0x38] sm:$0xff]
    %v137 = vld [vmem:[#allocation3 + $0x40] sm:$0xff]
    %v138 = vld [vmem:[#allocation3 + $0x48] sm:$0xff]
    %v139 = vld [vmem:[#allocation3 + $0x50] sm:$0xff]
    %v140 = vld [vmem:[#allocation3 + $0x58] sm:$0xff]
    %v141 = vld [vmem:[#allocation3 + $0x60] sm:$0xff]
    %v142 = vld [vmem:[#allocation3 + $0x68] sm:$0xff]
    %v143 = vld [vmem:[#allocation3 + $0x70] sm:$0xff]
    %v144 = vld [vmem:[#allocation3 + $0x78] sm:$0xff]
    %v145 = vmax.f32 %v129, %v65
    %v146 = vmax.f32 %v130, %v66
    %v147 = vmax.f32 %v131, %v67
    %v148 = vmax.f32 %v132, %v68
    %v149 = vmax.f32 %v133, %v69
    %v150 = vmax.f32 %v134, %v70
    %v151 = vmax.f32 %v135, %v71
    %v152 = vmax.f32 %v136, %v72
    %v153 = vmax.f32 %v137, %v73
    %v154 = vmax.f32 %v138, %v74
    %v155 = vmax.f32 %v139, %v75
    %v156 = vmax.f32 %v140, %v76
    %v157 = vmax.f32 %v141, %v77
    %v158 = vmax.f32 %v142, %v78
    %v159 = vmax.f32 %v143, %v79
    %v160 = vmax.f32 %v144, %v80
    %161 = vst [vmem:[#allocation3] sm:$0xff] %v145
    %162 = vst [vmem:[#allocation3 + $0x8] sm:$0xff] %v146
    %163 = vst [vmem:[#allocation3 + $0x10] sm:$0xff] %v147
    %164 = vst [vmem:[#allocation3 + $0x18] sm:$0xff] %v148
    %165 = vst [vmem:[#allocation3 + $0x20] sm:$0xff] %v149
    %166 = vst [vmem:[#allocation3 + $0x28] sm:$0xff] %v150
    %167 = vst [vmem:[#allocation3 + $0x30] sm:$0xff] %v151
    %168 = vst [vmem:[#allocation3 + $0x38] sm:$0xff] %v152
    %169 = vst [vmem:[#allocation3 + $0x40] sm:$0xff] %v153
    %170 = vst [vmem:[#allocation3 + $0x48] sm:$0xff] %v154
    %171 = vst [vmem:[#allocation3 + $0x50] sm:$0xff] %v155
    %172 = vst [vmem:[#allocation3 + $0x58] sm:$0xff] %v156
    %173 = vst [vmem:[#allocation3 + $0x60] sm:$0xff] %v157
    %174 = vst [vmem:[#allocation3 + $0x68] sm:$0xff] %v158
    %175 = vst [vmem:[#allocation3 + $0x70] sm:$0xff] %v159
    %176 = vst [vmem:[#allocation3 + $0x78] sm:$0xff] %v160
    %v177 = vld [vmem:[#allocation4 + $0x8] sm:$0xff]
    %v178 = vld [vmem:[#allocation4 + $0x18] sm:$0xff]
    %v179 = vld [vmem:[#allocation4 + $0x28] sm:$0xff]
    %v180 = vld [vmem:[#allocation4 + $0x38] sm:$0xff]
    %v181 = vld [vmem:[#allocation4 + $0x48] sm:$0xff]
    %v182 = vld [vmem:[#allocation4 + $0x58] sm:$0xff]
    %v183 = vld [vmem:[#allocation4 + $0x68] sm:$0xff]
    %v184 = vld [vmem:[#allocation4 + $0x78] sm:$0xff]
    %v185 = vld [vmem:[#allocation4 + $0x88] sm:$0xff]
    %v186 = vld [vmem:[#allocation4 + $0x98] sm:$0xff]
    %v187 = vld [vmem:[#allocation4 + $0xa8] sm:$0xff]
    %v188 = vld [vmem:[#allocation4 + $0xb8] sm:$0xff]
    %v189 = vld [vmem:[#allocation4 + $0xc8] sm:$0xff]
    %v190 = vld [vmem:[#allocation4 + $0xd8] sm:$0xff]
    %v191 = vld [vmem:[#allocation4 + $0xe8] sm:$0xff]
    %v192 = vld [vmem:[#allocation4 + $0xf8] sm:$0xff]
    %v193 = vld [vmem:[#allocation2] sm:$0xff]
    %v194 = vld [vmem:[#allocation2 + $0x8] sm:$0xff]
    %v195 = vld [vmem:[#allocation2 + $0x10] sm:$0xff]
    %v196 = vld [vmem:[#allocation2 + $0x18] sm:$0xff]
    %v197 = vld [vmem:[#allocation2 + $0x20] sm:$0xff]
    %v198 = vld [vmem:[#allocation2 + $0x28] sm:$0xff]
    %v199 = vld [vmem:[#allocation2 + $0x30] sm:$0xff]
    %v200 = vld [vmem:[#allocation2 + $0x38] sm:$0xff]
    %v201 = vld [vmem:[#allocation2 + $0x40] sm:$0xff]
    %v202 = vld [vmem:[#allocation2 + $0x48] sm:$0xff]
    %v203 = vld [vmem:[#allocation2 + $0x50] sm:$0xff]
    %v204 = vld [vmem:[#allocation2 + $0x58] sm:$0xff]
    %v205 = vld [vmem:[#allocation2 + $0x60] sm:$0xff]
    %v206 = vld [vmem:[#allocation2 + $0x68] sm:$0xff]
    %v207 = vld [vmem:[#allocation2 + $0x70] sm:$0xff]
    %v208 = vld [vmem:[#allocation2 + $0x78] sm:$0xff]
    %v209 = vadd.f32 %v193, %v177
    %v210 = vadd.f32 %v194, %v178
    %v211 = vadd.f32 %v195, %v179
    %v212 = vadd.f32 %v196, %v180
    %v213 = vadd.f32 %v197, %v181
    %v214 = vadd.f32 %v198, %v182
    %v215 = vadd.f32 %v199, %v183
    %v216 = vadd.f32 %v200, %v184
    %v217 = vadd.f32 %v201, %v185
    %v218 = vadd.f32 %v202, %v186
    %v219 = vadd.f32 %v203, %v187
    %v220 = vadd.f32 %v204, %v188
    %v221 = vadd.f32 %v205, %v189
    %v222 = vadd.f32 %v206, %v190
    %v223 = vadd.f32 %v207, %v191
    %v224 = vadd.f32 %v208, %v192
    %225 = vst [vmem:[#allocation2] sm:$0xff] %v209
    %226 = vst [vmem:[#allocation2 + $0x8] sm:$0xff] %v210
    %227 = vst [vmem:[#allocation2 + $0x10] sm:$0xff] %v211
    %228 = vst [vmem:[#allocation2 + $0x18] sm:$0xff] %v212
    %229 = vst [vmem:[#allocation2 + $0x20] sm:$0xff] %v213
    %230 = vst [vmem:[#allocation2 + $0x28] sm:$0xff] %v214
    %231 = vst [vmem:[#allocation2 + $0x30] sm:$0xff] %v215
    %232 = vst [vmem:[#allocation2 + $0x38] sm:$0xff] %v216
    %233 = vst [vmem:[#allocation2 + $0x40] sm:$0xff] %v217
    %234 = vst [vmem:[#allocation2 + $0x48] sm:$0xff] %v218
    %235 = vst [vmem:[#allocation2 + $0x50] sm:$0xff] %v219
    %236 = vst [vmem:[#allocation2 + $0x58] sm:$0xff] %v220
    %237 = vst [vmem:[#allocation2 + $0x60] sm:$0xff] %v221
    %238 = vst [vmem:[#allocation2 + $0x68] sm:$0xff] %v222
    %239 = vst [vmem:[#allocation2 + $0x70] sm:$0xff] %v223
    %240 = vst [vmem:[#allocation2 + $0x78] sm:$0xff] %v224
    %v241 = vld [vmem:[#allocation3] sm:$0xff]
    %v242 = vld [vmem:[#allocation3 + $0x8] sm:$0xff]
    %v243 = vld [vmem:[#allocation3 + $0x10] sm:$0xff]
    %v244 = vld [vmem:[#allocation3 + $0x18] sm:$0xff]
    %v245 = vld [vmem:[#allocation3 + $0x20] sm:$0xff]
    %v246 = vld [vmem:[#allocation3 + $0x28] sm:$0xff]
    %v247 = vld [vmem:[#allocation3 + $0x30] sm:$0xff]
    %v248 = vld [vmem:[#allocation3 + $0x38] sm:$0xff]
    %v249 = vld [vmem:[#allocation3 + $0x40] sm:$0xff]
    %v250 = vld [vmem:[#allocation3 + $0x48] sm:$0xff]
    %v251 = vld [vmem:[#allocation3 + $0x50] sm:$0xff]
    %v252 = vld [vmem:[#allocation3 + $0x58] sm:$0xff]
    %v253 = vld [vmem:[#allocation3 + $0x60] sm:$0xff]
    %v254 = vld [vmem:[#allocation3 + $0x68] sm:$0xff]
    %v255 = vld [vmem:[#allocation3 + $0x70] sm:$0xff]
    %v256 = vld [vmem:[#allocation3 + $0x78] sm:$0xff]
    %v257 = vmax.f32 %v241, %v177
    %v258 = vmax.f32 %v242, %v178
    %v259 = vmax.f32 %v243, %v179
    %v260 = vmax.f32 %v244, %v180
    %v261 = vmax.f32 %v245, %v181
    %v262 = vmax.f32 %v246, %v182
    %v263 = vmax.f32 %v247, %v183
    %v264 = vmax.f32 %v248, %v184
    %v265 = vmax.f32 %v249, %v185
    %v266 = vmax.f32 %v250, %v186
    %v267 = vmax.f32 %v251, %v187
    %v268 = vmax.f32 %v252, %v188
    %v269 = vmax.f32 %v253, %v189
    %v270 = vmax.f32 %v254, %v190
    %v271 = vmax.f32 %v255, %v191
    %v272 = vmax.f32 %v256, %v192
    %273 = vst [vmem:[#allocation3] sm:$0xff] %v257
    %274 = vst [vmem:[#allocation3 + $0x8] sm:$0xff] %v258
    %275 = vst [vmem:[#allocation3 + $0x10] sm:$0xff] %v259
    %276 = vst [vmem:[#allocation3 + $0x18] sm:$0xff] %v260
    %277 = vst [vmem:[#allocation3 + $0x20] sm:$0xff] %v261
    %278 = vst [vmem:[#allocation3 + $0x28] sm:$0xff] %v262
    %279 = vst [vmem:[#allocation3 + $0x30] sm:$0xff] %v263
    %280 = vst [vmem:[#allocation3 + $0x38] sm:$0xff] %v264
    %281 = vst [vmem:[#allocation3 + $0x40] sm:$0xff] %v265
    %282 = vst [vmem:[#allocation3 + $0x48] sm:$0xff] %v266
    %283 = vst [vmem:[#allocation3 + $0x50] sm:$0xff] %v267
    %284 = vst [vmem:[#allocation3 + $0x58] sm:$0xff] %v268
    %285 = vst [vmem:[#allocation3 + $0x60] sm:$0xff] %v269
    %286 = vst [vmem:[#allocation3 + $0x68] sm:$0xff] %v270
    %287 = vst [vmem:[#allocation3 + $0x70] sm:$0xff] %v271
    %288 = vst [vmem:[#allocation3 + $0x78] sm:$0xff] %v272
    // Predicated region
    $region22: #{tpu_custom_call.1} parent=1 // pred_check
      %p289 = pneg %p29
    $region23: #{tpu_custom_call.1} parent=1 // pred_check_branch
      %291 = sbr.rel (%p289) target = $region25
    $region24: #{tpu_custom_call.1} parent=1 // pred_region
      %v292 = vld [vmem:[%s1] sm:$0xff]
      %v293 = vld [vmem:[%s1 + $0x8] sm:$0xff]
      %v294 = vld [vmem:[%s1 + $0x10] sm:$0xff]
      %v295 = vld [vmem:[%s1 + $0x18] sm:$0xff]
      %v296 = vld [vmem:[%s1 + $0x20] sm:$0xff]
      %v297 = vld [vmem:[%s1 + $0x28] sm:$0xff]
      %v298 = vld [vmem:[%s1 + $0x30] sm:$0xff]
      %v299 = vld [vmem:[%s1 + $0x38] sm:$0xff]
      %v300 = vld [vmem:[%s2] sm:$0xf]
      %v301 = vld [vmem:[#allocation2] sm:$0xff]
      %v302 = vld [vmem:[#allocation2 + $0x8] sm:$0xff]
      %v303 = vld [vmem:[#allocation2 + $0x10] sm:$0xff]
      %v304 = vld [vmem:[#allocation2 + $0x18] sm:$0xff]
      %v305 = vld [vmem:[#allocation2 + $0x20] sm:$0xff]
      %v306 = vld [vmem:[#allocation2 + $0x28] sm:$0xff]
      %v307 = vld [vmem:[#allocation2 + $0x30] sm:$0xff]
      %v308 = vld [vmem:[#allocation2 + $0x38] sm:$0xff]
      %v309 = vld [vmem:[#allocation2 + $0x40] sm:$0xff]
      %v310 = vld [vmem:[#allocation2 + $0x48] sm:$0xff]
      %v311 = vld [vmem:[#allocation2 + $0x50] sm:$0xff]
      %v312 = vld [vmem:[#allocation2 + $0x58] sm:$0xff]
      %v313 = vld [vmem:[#allocation2 + $0x60] sm:$0xff]
      %v314 = vld [vmem:[#allocation2 + $0x68] sm:$0xff]
      %v315 = vld [vmem:[#allocation2 + $0x70] sm:$0xff]
      %v316 = vld [vmem:[#allocation2 + $0x78] sm:$0xff]
      %317 = vadd.xlane.f32.xlu0 %v301
      %v318 = vpop.xlane.xlu0 %317
      %319 = vadd.xlane.f32.xlu0 %v302
      %v320 = vpop.xlane.xlu0 %319
      %321 = vadd.xlane.f32.xlu0 %v303
      %v322 = vpop.xlane.xlu0 %321
      %323 = vadd.xlane.f32.xlu0 %v304
      %v324 = vpop.xlane.xlu0 %323
      %325 = vadd.xlane.f32.xlu0 %v305
      %v326 = vpop.xlane.xlu0 %325
      %327 = vadd.xlane.f32.xlu0 %v306
      %v328 = vpop.xlane.xlu0 %327
      %329 = vadd.xlane.f32.xlu0 %v307
      %v330 = vpop.xlane.xlu0 %329
      %331 = vadd.xlane.f32.xlu0 %v308
      %v332 = vpop.xlane.xlu0 %331
      %333 = vadd.xlane.f32.xlu0 %v309
      %v334 = vpop.xlane.xlu0 %333
      %335 = vadd.xlane.f32.xlu0 %v310
      %v336 = vpop.xlane.xlu0 %335
      %337 = vadd.xlane.f32.xlu0 %v311
      %v338 = vpop.xlane.xlu0 %337
      %339 = vadd.xlane.f32.xlu0 %v312
      %v340 = vpop.xlane.xlu0 %339
      %341 = vadd.xlane.f32.xlu0 %v313
      %v342 = vpop.xlane.xlu0 %341
      %343 = vadd.xlane.f32.xlu0 %v314
      %v344 = vpop.xlane.xlu0 %343
      %345 = vadd.xlane.f32.xlu0 %v315
      %v346 = vpop.xlane.xlu0 %345
      %347 = vadd.xlane.f32.xlu0 %v316
      %v348 = vpop.xlane.xlu0 %347
      %v349 = vmul.f32 %v318, 0.00390625
      %v350 = vmul.f32 %v320, 0.00390625
      %v351 = vmul.f32 %v322, 0.00390625
      %v352 = vmul.f32 %v324, 0.00390625
      %v353 = vmul.f32 %v326, 0.00390625
      %v354 = vmul.f32 %v328, 0.00390625
      %v355 = vmul.f32 %v330, 0.00390625
      %v356 = vmul.f32 %v332, 0.00390625
      %v357 = vmul.f32 %v334, 0.00390625
      %v358 = vmul.f32 %v336, 0.00390625
      %v359 = vmul.f32 %v338, 0.00390625
      %v360 = vmul.f32 %v340, 0.00390625
      %v361 = vmul.f32 %v342, 0.00390625
      %v362 = vmul.f32 %v344, 0.00390625
      %v363 = vmul.f32 %v346, 0.00390625
      %v364 = vmul.f32 %v348, 0.00390625
      %v365 = vld [vmem:[#allocation3] sm:$0xff]
      %v366 = vld [vmem:[#allocation3 + $0x8] sm:$0xff]
      %v367 = vld [vmem:[#allocation3 + $0x10] sm:$0xff]
      %v368 = vld [vmem:[#allocation3 + $0x18] sm:$0xff]
      %v369 = vld [vmem:[#allocation3 + $0x20] sm:$0xff]
      %v370 = vld [vmem:[#allocation3 + $0x28] sm:$0xff]
      %v371 = vld [vmem:[#allocation3 + $0x30] sm:$0xff]
      %v372 = vld [vmem:[#allocation3 + $0x38] sm:$0xff]
      %v373 = vld [vmem:[#allocation3 + $0x40] sm:$0xff]
      %v374 = vld [vmem:[#allocation3 + $0x48] sm:$0xff]
      %v375 = vld [vmem:[#allocation3 + $0x50] sm:$0xff]
      %v376 = vld [vmem:[#allocation3 + $0x58] sm:$0xff]
      %v377 = vld [vmem:[#allocation3 + $0x60] sm:$0xff]
      %v378 = vld [vmem:[#allocation3 + $0x68] sm:$0xff]
      %v379 = vld [vmem:[#allocation3 + $0x70] sm:$0xff]
      %v380 = vld [vmem:[#allocation3 + $0x78] sm:$0xff]
      %381 = vmax.xlane.f32.xlu0 %v365
      %v382 = vpop.xlane.xlu0 %381
      %383 = vmax.xlane.f32.xlu0 %v366
      %v384 = vpop.xlane.xlu0 %383
      %385 = vmax.xlane.f32.xlu0 %v367
      %v386 = vpop.xlane.xlu0 %385
      %387 = vmax.xlane.f32.xlu0 %v368
      %v388 = vpop.xlane.xlu0 %387
      %389 = vmax.xlane.f32.xlu0 %v369
      %v390 = vpop.xlane.xlu0 %389
      %391 = vmax.xlane.f32.xlu0 %v370
      %v392 = vpop.xlane.xlu0 %391
      %393 = vmax.xlane.f32.xlu0 %v371
      %v394 = vpop.xlane.xlu0 %393
      %395 = vmax.xlane.f32.xlu0 %v372
      %v396 = vpop.xlane.xlu0 %395
      %397 = vmax.xlane.f32.xlu0 %v373
      %v398 = vpop.xlane.xlu0 %397
      %399 = vmax.xlane.f32.xlu0 %v374
      %v400 = vpop.xlane.xlu0 %399
      %401 = vmax.xlane.f32.xlu0 %v375
      %v402 = vpop.xlane.xlu0 %401
      %403 = vmax.xlane.f32.xlu0 %v376
      %v404 = vpop.xlane.xlu0 %403
      %405 = vmax.xlane.f32.xlu0 %v377
      %v406 = vpop.xlane.xlu0 %405
      %407 = vmax.xlane.f32.xlu0 %v378
      %v408 = vpop.xlane.xlu0 %407
      %409 = vmax.xlane.f32.xlu0 %v379
      %v410 = vpop.xlane.xlu0 %409
      %411 = vmax.xlane.f32.xlu0 %v380
      %v412 = vpop.xlane.xlu0 %411
      %v429 = vlaneseq
      %v430 = vand.u32 %v429, 127
      %v431 = vlaneseq
      %v432 = vshrl.u32 %v431, 7
      %v433 = vsub.s32 %v430, %v432
      %v434 = vrot.slane %v349, %v433
      %v435 = vadd.s32 %v430, 4294967288
      %v436 = vlaneseq
      %v437 = vshrl.u32 %v436, 7
      %v438 = vsub.s32 %v435, %v437
      %v439 = vrot.slane %v350, %v438
      %vm440 = vcmask 130112
      %v441 = vsel %vm440, %v439, %v434
      %v442 = vadd.s32 %v430, 4294967280
      %v443 = vlaneseq
      %v444 = vshrl.u32 %v443, 7
      %v445 = vsub.s32 %v442, %v444
      %v446 = vrot.slane %v351, %v445
      %vm447 = vcmask 195712
      %v448 = vsel %vm447, %v446, %v441
      %v449 = vadd.s32 %v430, 4294967272
      %v450 = vlaneseq
      %v451 = vshrl.u32 %v450, 7
      %v452 = vsub.s32 %v449, %v451
      %v453 = vrot.slane %v352, %v452
      %vm454 = vcmask 261312
      %v455 = vsel %vm454, %v453, %v448
      %v456 = vadd.s32 %v430, 4294967264
      %v457 = vlaneseq
      %v458 = vshrl.u32 %v457, 7
      %v459 = vsub.s32 %v456, %v458
      %v460 = vrot.slane %v353, %v459
      %vm461 = vcmask 326912
      %v462 = vsel %vm461, %v460, %v455
      %v463 = vadd.s32 %v430, 4294967256
      %v464 = vlaneseq
      %v465 = vshrl.u32 %v464, 7
      %v466 = vsub.s32 %v463, %v465
      %v467 = vrot.slane %v354, %v466
      %vm468 = vcmask 392512
      %v469 = vsel %vm468, %v467, %v462
      %v470 = vadd.s32 %v430, 4294967248
      %v471 = vlaneseq
      %v472 = vshrl.u32 %v471, 7
      %v473 = vsub.s32 %v470, %v472
      %v474 = vrot.slane %v355, %v473
      %vm475 = vcmask 458112
      %v476 = vsel %vm475, %v474, %v469
      %v477 = vadd.s32 %v430, 4294967240
      %v478 = vlaneseq
      %v479 = vshrl.u32 %v478, 7
      %v480 = vsub.s32 %v477, %v479
      %v481 = vrot.slane %v356, %v480
      %vm482 = vcmask 523712
      %v483 = vsel %vm482, %v481, %v476
      %v484 = vlaneseq
      %v485 = vshrl.u32 %v484, 7
      %v486 = vsub.s32 %v430, %v485
      %v487 = vrot.slane %v357, %v486
      %v488 = vlaneseq
      %v489 = vshrl.u32 %v488, 7
      %v490 = vsub.s32 %v435, %v489
      %v491 = vrot.slane %v358, %v490
      %v492 = vsel %vm440, %v491, %v487
      %v493 = vlaneseq
      %v494 = vshrl.u32 %v493, 7
      %v495 = vsub.s32 %v442, %v494
      %v496 = vrot.slane %v359, %v495
      %v497 = vsel %vm447, %v496, %v492
      %v498 = vlaneseq
      %v499 = vshrl.u32 %v498, 7
      %v500 = vsub.s32 %v449, %v499
      %v501 = vrot.slane %v360, %v500
      %v502 = vsel %vm454, %v501, %v497
      %v503 = vlaneseq
      %v504 = vshrl.u32 %v503, 7
      %v505 = vsub.s32 %v456, %v504
      %v506 = vrot.slane %v361, %v505
      %v507 = vsel %vm461, %v506, %v502
      %v508 = vlaneseq
      %v509 = vshrl.u32 %v508, 7
      %v510 = vsub.s32 %v463, %v509
      %v511 = vrot.slane %v362, %v510
      %v512 = vsel %vm468, %v511, %v507
      %v513 = vlaneseq
      %v514 = vshrl.u32 %v513, 7
      %v515 = vsub.s32 %v470, %v514
      %v516 = vrot.slane %v363, %v515
      %v517 = vsel %vm475, %v516, %v512
      %v518 = vlaneseq
      %v519 = vshrl.u32 %v518, 7
      %v520 = vsub.s32 %v477, %v519
      %v521 = vrot.slane %v364, %v520
      %v522 = vsel %vm482, %v521, %v517
      %vm523 = vcmask 1041409
      %v524 = vsel %vm523, %v522, %v483
      %vm525 = vcmask 523264
      %v526 = vsel %vm525, %v524, 0
      %528 = vmatprep.subr.mxu0 0.0
      %529 = vmatpush1.msra.mxu0 %v292
      %530 = vmatprep.subr.mxu0 0.0
      %531 = vmatpush1.msra.mxu0 %v293
      %532 = vmatprep.subr.mxu0 0.0
      %533 = vmatpush1.msra.mxu0 %v294
      %534 = vmatprep.subr.mxu0 0.0
      %535 = vmatpush1.msra.mxu0 %v295
      %536 = vmatprep.subr.mxu0 0.0
      %537 = vmatpush1.msra.mxu0 %v296
      %538 = vmatprep.subr.mxu0 0.0
      %539 = vmatpush1.msra.mxu0 %v297
      %540 = vmatprep.subr.mxu0 0.0
      %541 = vmatpush1.msra.mxu0 %v298
      %542 = vmatprep.subr.mxu0 0.0
      %543 = vmatpush1.msra.mxu0 %v299
      %544 = vmatprep.subr.mxu0 0.0
      %545 = vmatpush1.msra.mxu0 0.0
      %546 = vmatprep.subr.mxu0 0.0
      %547 = vmatpush1.msra.mxu0 0.0
      %548 = vmatprep.subr.mxu0 0.0
      %549 = vmatpush1.msra.mxu0 0.0
      %550 = vmatprep.subr.mxu0 0.0
      %551 = vmatpush1.msra.mxu0 0.0
      %552 = vmatprep.subr.mxu0 0.0
      %553 = vmatpush1.msra.mxu0 0.0
      %554 = vmatprep.subr.mxu0 0.0
      %555 = vmatpush1.msra.mxu0 0.0
      %556 = vmatprep.subr.mxu0 0.0
      %557 = vmatpush1.msra.mxu0 0.0
      %558 = vmatprep.subr.mxu0 0.0
      %559 = vmatpush1.msra.mxu0 0.0
      %560 = vmatprep.subr.mxu0 0.0
      %561 = vmatpush1.msra.mxu0 0.0
      %562 = vmatprep.subr.mxu0 0.0
      %563 = vmatpush1.msra.mxu0 0.0
      %564 = vmatprep.subr.mxu0 0.0
      %565 = vmatpush1.msra.mxu0 0.0
      %566 = vmatprep.subr.mxu0 0.0
      %567 = vmatpush1.msra.mxu0 0.0
      %568 = vmatprep.subr.mxu0 0.0
      %569 = vmatpush1.msra.mxu0 0.0
      %570 = vmatprep.subr.mxu0 0.0
      %571 = vmatpush1.msra.mxu0 0.0
      %572 = vmatprep.subr.mxu0 0.0
      %573 = vmatpush1.msra.mxu0 0.0
      %574 = vmatprep.subr.mxu0 0.0
      %575 = vmatpush1.msra.mxu0 0.0
      %576 = vmatprep.subr.mxu0 0.0
      %577 = vmatpush1.msra.mxu0 0.0
      %578 = vmatprep.subr.mxu0 0.0
      %579 = vmatpush1.msra.mxu0 0.0
      %580 = vmatprep.subr.mxu0 0.0
      %581 = vmatpush1.msra.mxu0 0.0
      %582 = vmatprep.subr.mxu0 0.0
      %583 = vmatpush1.msra.mxu0 0.0
      %584 = vmatprep.subr.mxu0 0.0
      %585 = vmatpush1.msra.mxu0 0.0
      %586 = vmatprep.subr.mxu0 0.0
      %587 = vmatpush1.msra.mxu0 0.0
      %588 = vmatprep.subr.mxu0 0.0
      %589 = vmatpush1.msra.mxu0 0.0
      %590 = vmatprep.subr.mxu0 0.0
      %591 = vmatpush1.msra.mxu0 0.0
      %592 = vmatprep.mubr.f32.mxu0 0.0
      %593 = vmatmul.mubr.f32.gmra.mrb[0].mxu0 %v526
      %v594 = vpop.f32.mrb[0].mxu0
      %v595 = vadd.f32 0.0, %v594
      %v596 = vpop.f32.mrb[0].mxu0
      %597 = vdwg.mxu0
      %v598 = vmax.f32 %v595, 0.0
      %v615 = vlaneseq
      %v616 = vshrl.u32 %v615, 7
      %v617 = vsub.s32 %v430, %v616
      %v618 = vrot.slane %v382, %v617
      %v619 = vlaneseq
      %v620 = vshrl.u32 %v619, 7
      %v621 = vsub.s32 %v435, %v620
      %v622 = vrot.slane %v384, %v621
      %v623 = vsel %vm440, %v622, %v618
      %v624 = vlaneseq
      %v625 = vshrl.u32 %v624, 7
      %v626 = vsub.s32 %v442, %v625
      %v627 = vrot.slane %v386, %v626
      %v628 = vsel %vm447, %v627, %v623
      %v629 = vlaneseq
      %v630 = vshrl.u32 %v629, 7
      %v631 = vsub.s32 %v449, %v630
      %v632 = vrot.slane %v388, %v631
      %v633 = vsel %vm454, %v632, %v628
      %v634 = vlaneseq
      %v635 = vshrl.u32 %v634, 7
      %v636 = vsub.s32 %v456, %v635
      %v637 = vrot.slane %v390, %v636
      %v638 = vsel %vm461, %v637, %v633
      %v639 = vlaneseq
      %v640 = vshrl.u32 %v639, 7
      %v641 = vsub.s32 %v463, %v640
      %v642 = vrot.slane %v392, %v641
      %v643 = vsel %vm468, %v642, %v638
      %v644 = vlaneseq
      %v645 = vshrl.u32 %v644, 7
      %v646 = vsub.s32 %v470, %v645
      %v647 = vrot.slane %v394, %v646
      %v648 = vsel %vm475, %v647, %v643
      %v649 = vlaneseq
      %v650 = vshrl.u32 %v649, 7
      %v651 = vsub.s32 %v477, %v650
      %v652 = vrot.slane %v396, %v651
      %v653 = vsel %vm482, %v652, %v648
      %v654 = vlaneseq
      %v655 = vshrl.u32 %v654, 7
      %v656 = vsub.s32 %v430, %v655
      %v657 = vrot.slane %v398, %v656
      %v658 = vlaneseq
      %v659 = vshrl.u32 %v658, 7
      %v660 = vsub.s32 %v435, %v659
      %v661 = vrot.slane %v400, %v660
      %v662 = vsel %vm440, %v661, %v657
      %v663 = vlaneseq
      %v664 = vshrl.u32 %v663, 7
      %v665 = vsub.s32 %v442, %v664
      %v666 = vrot.slane %v402, %v665
      %v667 = vsel %vm447, %v666, %v662
      %v668 = vlaneseq
      %v669 = vshrl.u32 %v668, 7
      %v670 = vsub.s32 %v449, %v669
      %v671 = vrot.slane %v404, %v670
      %v672 = vsel %vm454, %v671, %v667
      %v673 = vlaneseq
      %v674 = vshrl.u32 %v673, 7
      %v675 = vsub.s32 %v456, %v674
      %v676 = vrot.slane %v406, %v675
      %v677 = vsel %vm461, %v676, %v672
      %v678 = vlaneseq
      %v679 = vshrl.u32 %v678, 7
      %v680 = vsub.s32 %v463, %v679
      %v681 = vrot.slane %v408, %v680
      %v682 = vsel %vm468, %v681, %v677
      %v683 = vlaneseq
      %v684 = vshrl.u32 %v683, 7
      %v685 = vsub.s32 %v470, %v684
      %v686 = vrot.slane %v410, %v685
      %v687 = vsel %vm475, %v686, %v682
      %v688 = vlaneseq
      %v689 = vshrl.u32 %v688, 7
      %v690 = vsub.s32 %v477, %v689
      %v691 = vrot.slane %v412, %v690
      %v692 = vsel %vm482, %v691, %v687
      %v693 = vsel %vm523, %v692, %v653
      %v694 = vsel %vm525, %v693, 0
      %696 = vmatprep.subr.mxu0 0.0
      %697 = vmatpush1.msra.mxu0 %v292
      %698 = vmatprep.subr.mxu0 0.0
      %699 = vmatpush1.msra.mxu0 %v293
      %700 = vmatprep.subr.mxu0 0.0
      %701 = vmatpush1.msra.mxu0 %v294
      %702 = vmatprep.subr.mxu0 0.0
      %703 = vmatpush1.msra.mxu0 %v295
      %704 = vmatprep.subr.mxu0 0.0
      %705 = vmatpush1.msra.mxu0 %v296
      %706 = vmatprep.subr.mxu0 0.0
      %707 = vmatpush1.msra.mxu0 %v297
      %708 = vmatprep.subr.mxu0 0.0
      %709 = vmatpush1.msra.mxu0 %v298
      %710 = vmatprep.subr.mxu0 0.0
      %711 = vmatpush1.msra.mxu0 %v299
      %712 = vmatprep.subr.mxu0 0.0
      %713 = vmatpush1.msra.mxu0 0.0
      %714 = vmatprep.subr.mxu0 0.0
      %715 = vmatpush1.msra.mxu0 0.0
      %716 = vmatprep.subr.mxu0 0.0
      %717 = vmatpush1.msra.mxu0 0.0
      %718 = vmatprep.subr.mxu0 0.0
      %719 = vmatpush1.msra.mxu0 0.0
      %720 = vmatprep.subr.mxu0 0.0
      %721 = vmatpush1.msra.mxu0 0.0
      %722 = vmatprep.subr.mxu0 0.0
      %723 = vmatpush1.msra.mxu0 0.0
      %724 = vmatprep.subr.mxu0 0.0
      %725 = vmatpush1.msra.mxu0 0.0
      %726 = vmatprep.subr.mxu0 0.0
      %727 = vmatpush1.msra.mxu0 0.0
      %728 = vmatprep.subr.mxu0 0.0
      %729 = vmatpush1.msra.mxu0 0.0
      %730 = vmatprep.subr.mxu0 0.0
      %731 = vmatpush1.msra.mxu0 0.0
      %732 = vmatprep.subr.mxu0 0.0
      %733 = vmatpush1.msra.mxu0 0.0
      %734 = vmatprep.subr.mxu0 0.0
      %735 = vmatpush1.msra.mxu0 0.0
      %736 = vmatprep.subr.mxu0 0.0
      %737 = vmatpush1.msra.mxu0 0.0
      %738 = vmatprep.subr.mxu0 0.0
      %739 = vmatpush1.msra.mxu0 0.0
      %740 = vmatprep.subr.mxu0 0.0
      %741 = vmatpush1.msra.mxu0 0.0
      %742 = vmatprep.subr.mxu0 0.0
      %743 = vmatpush1.msra.mxu0 0.0
      %744 = vmatprep.subr.mxu0 0.0
      %745 = vmatpush1.msra.mxu0 0.0
      %746 = vmatprep.subr.mxu0 0.0
      %747 = vmatpush1.msra.mxu0 0.0
      %748 = vmatprep.subr.mxu0 0.0
      %749 = vmatpush1.msra.mxu0 0.0
      %750 = vmatprep.subr.mxu0 0.0
      %751 = vmatpush1.msra.mxu0 0.0
      %752 = vmatprep.subr.mxu0 0.0
      %753 = vmatpush1.msra.mxu0 0.0
      %754 = vmatprep.subr.mxu0 0.0
      %755 = vmatpush1.msra.mxu0 0.0
      %756 = vmatprep.subr.mxu0 0.0
      %757 = vmatpush1.msra.mxu0 0.0
      %758 = vmatprep.subr.mxu0 0.0
      %759 = vmatpush1.msra.mxu0 0.0
      %760 = vmatprep.mubr.f32.mxu0 0.0
      %761 = vmatmul.mubr.f32.gmra.mrb[0].mxu0 %v694
      %v762 = vpop.f32.mrb[0].mxu0
      %v763 = vadd.f32 0.0, %v762
      %v764 = vpop.f32.mrb[0].mxu0
      %765 = vdwg.mxu0
      %v766 = vmax.f32 %v763, 0.0
      %vm767 = vcmask 31744
      %v769 = vsel %vm767, %v766, 0
      %vm771 = vcmask 1043456
      %v773 = vsel %vm771, %v300, 0
      %775 = vmatprep.subr.mxu0 0.0
      %776 = vmatpush1.msra.mxu0 %v773
      %777 = vmatprep.subr.mxu0 0.0
      %778 = vmatpush1.msra.mxu0 0.0
      %779 = vmatprep.subr.mxu0 0.0
      %780 = vmatpush1.msra.mxu0 0.0
      %781 = vmatprep.subr.mxu0 0.0
      %782 = vmatpush1.msra.mxu0 0.0
      %783 = vmatprep.subr.mxu0 0.0
      %784 = vmatpush1.msra.mxu0 0.0
      %785 = vmatprep.subr.mxu0 0.0
      %786 = vmatpush1.msra.mxu0 0.0
      %787 = vmatprep.subr.mxu0 0.0
      %788 = vmatpush1.msra.mxu0 0.0
      %789 = vmatprep.subr.mxu0 0.0
      %790 = vmatpush1.msra.mxu0 0.0
      %791 = vmatprep.subr.mxu0 0.0
      %792 = vmatpush1.msra.mxu0 0.0
      %793 = vmatprep.subr.mxu0 0.0
      %794 = vmatpush1.msra.mxu0 0.0
      %795 = vmatprep.subr.mxu0 0.0
      %796 = vmatpush1.msra.mxu0 0.0
      %797 = vmatprep.subr.mxu0 0.0
      %798 = vmatpush1.msra.mxu0 0.0
      %799 = vmatprep.subr.mxu0 0.0
      %800 = vmatpush1.msra.mxu0 0.0
      %801 = vmatprep.subr.mxu0 0.0
      %802 = vmatpush1.msra.mxu0 0.0
      %803 = vmatprep.subr.mxu0 0.0
      %804 = vmatpush1.msra.mxu0 0.0
      %805 = vmatprep.subr.mxu0 0.0
      %806 = vmatpush1.msra.mxu0 0.0
      %807 = vmatprep.subr.mxu0 0.0
      %808 = vmatpush1.msra.mxu0 0.0
      %809 = vmatprep.subr.mxu0 0.0
      %810 = vmatpush1.msra.mxu0 0.0
      %811 = vmatprep.subr.mxu0 0.0
      %812 = vmatpush1.msra.mxu0 0.0
      %813 = vmatprep.subr.mxu0 0.0
      %814 = vmatpush1.msra.mxu0 0.0
      %815 = vmatprep.subr.mxu0 0.0
      %816 = vmatpush1.msra.mxu0 0.0
      %817 = vmatprep.subr.mxu0 0.0
      %818 = vmatpush1.msra.mxu0 0.0
      %819 = vmatprep.subr.mxu0 0.0
      %820 = vmatpush1.msra.mxu0 0.0
      %821 = vmatprep.subr.mxu0 0.0
      %822 = vmatpush1.msra.mxu0 0.0
      %823 = vmatprep.subr.mxu0 0.0
      %824 = vmatpush1.msra.mxu0 0.0
      %825 = vmatprep.subr.mxu0 0.0
      %826 = vmatpush1.msra.mxu0 0.0
      %827 = vmatprep.subr.mxu0 0.0
      %828 = vmatpush1.msra.mxu0 0.0
      %829 = vmatprep.subr.mxu0 0.0
      %830 = vmatpush1.msra.mxu0 0.0
      %831 = vmatprep.subr.mxu0 0.0
      %832 = vmatpush1.msra.mxu0 0.0
      %833 = vmatprep.subr.mxu0 0.0
      %834 = vmatpush1.msra.mxu0 0.0
      %835 = vmatprep.subr.mxu0 0.0
      %836 = vmatpush1.msra.mxu0 0.0
      %837 = vmatprep.subr.mxu0 0.0
      %838 = vmatpush1.msra.mxu0 0.0
      %839 = vmatprep.mubr.f32.mxu0 0.0
      %840 = vmatmul.mubr.f32.gmra.mrb[0].mxu0 %v769
      %v841 = vpop.f32.mrb[0].mxu0
      %v842 = vadd.f32 0.0, %v841
      %v843 = vpop.f32.mrb[0].mxu0
      %844 = vdwg.mxu0
      %v846 = vsel %vm767, %v598, 0
      %848 = vmatprep.subr.mxu0 0.0
      %849 = vmatpush1.msra.mxu0 %v773
      %850 = vmatprep.subr.mxu0 0.0
      %851 = vmatpush1.msra.mxu0 0.0
      %852 = vmatprep.subr.mxu0 0.0
      %853 = vmatpush1.msra.mxu0 0.0
      %854 = vmatprep.subr.mxu0 0.0
      %855 = vmatpush1.msra.mxu0 0.0
      %856 = vmatprep.subr.mxu0 0.0
      %857 = vmatpush1.msra.mxu0 0.0
      %858 = vmatprep.subr.mxu0 0.0
      %859 = vmatpush1.msra.mxu0 0.0
      %860 = vmatprep.subr.mxu0 0.0
      %861 = vmatpush1.msra.mxu0 0.0
      %862 = vmatprep.subr.mxu0 0.0
      %863 = vmatpush1.msra.mxu0 0.0
      %864 = vmatprep.subr.mxu0 0.0
      %865 = vmatpush1.msra.mxu0 0.0
      %866 = vmatprep.subr.mxu0 0.0
      %867 = vmatpush1.msra.mxu0 0.0
      %868 = vmatprep.subr.mxu0 0.0
      %869 = vmatpush1.msra.mxu0 0.0
      %870 = vmatprep.subr.mxu0 0.0
      %871 = vmatpush1.msra.mxu0 0.0
      %872 = vmatprep.subr.mxu0 0.0
      %873 = vmatpush1.msra.mxu0 0.0
      %874 = vmatprep.subr.mxu0 0.0
      %875 = vmatpush1.msra.mxu0 0.0
      %876 = vmatprep.subr.mxu0 0.0
      %877 = vmatpush1.msra.mxu0 0.0
      %878 = vmatprep.subr.mxu0 0.0
      %879 = vmatpush1.msra.mxu0 0.0
      %880 = vmatprep.subr.mxu0 0.0
      %881 = vmatpush1.msra.mxu0 0.0
      %882 = vmatprep.subr.mxu0 0.0
      %883 = vmatpush1.msra.mxu0 0.0
      %884 = vmatprep.subr.mxu0 0.0
      %885 = vmatpush1.msra.mxu0 0.0
      %886 = vmatprep.subr.mxu0 0.0
      %887 = vmatpush1.msra.mxu0 0.0
      %888 = vmatprep.subr.mxu0 0.0
      %889 = vmatpush1.msra.mxu0 0.0
      %890 = vmatprep.subr.mxu0 0.0
      %891 = vmatpush1.msra.mxu0 0.0
      %892 = vmatprep.subr.mxu0 0.0
      %893 = vmatpush1.msra.mxu0 0.0
      %894 = vmatprep.subr.mxu0 0.0
      %895 = vmatpush1.msra.mxu0 0.0
      %896 = vmatprep.subr.mxu0 0.0
      %897 = vmatpush1.msra.mxu0 0.0
      %898 = vmatprep.subr.mxu0 0.0
      %899 = vmatpush1.msra.mxu0 0.0
      %900 = vmatprep.subr.mxu0 0.0
      %901 = vmatpush1.msra.mxu0 0.0
      %902 = vmatprep.subr.mxu0 0.0
      %903 = vmatpush1.msra.mxu0 0.0
      %904 = vmatprep.subr.mxu0 0.0
      %905 = vmatpush1.msra.mxu0 0.0
      %906 = vmatprep.subr.mxu0 0.0
      %907 = vmatpush1.msra.mxu0 0.0
      %908 = vmatprep.subr.mxu0 0.0
      %909 = vmatpush1.msra.mxu0 0.0
      %910 = vmatprep.subr.mxu0 0.0
      %911 = vmatpush1.msra.mxu0 0.0
      %912 = vmatprep.mubr.f32.mxu0 0.0
      %913 = vmatmul.mubr.f32.gmra.mrb[0].mxu0 %v846
      %v914 = vpop.f32.mrb[0].mxu0
      %v915 = vadd.f32 %v842, %v914
      %v916 = vpop.f32.mrb[0].mxu0
      %917 = vdwg.mxu0
      %v918 = vsub.f32 0.0, %v915
      %v919 = vmul.f32 %v918, 1.442695
      %v920 = vpow.pop %v919
      %v921 = vadd.f32 %v920, 1.0
      %v922 = vrcp.pop %v921
      %v923 = vmul.f32 1.0, %v922
      %vm924 = vcmask 517120
      %925 = vst.msk [vmem:[#allocation7] sm:$0x3] %vm924, %v923
    $region25: #{tpu_custom_call.1} parent=1 // pred_fallthru
      _
    // Predicated region
    $region26: #{tpu_custom_call.1} parent=1 // pred_check
      _
    $region27: #{tpu_custom_call.1} parent=1 // pred_check_branch
      %927 = sbr.rel (0) target = $region29
    $region28: #{tpu_custom_call.1} parent=1 // pred_region
      %s929 = ssub.s32 32, 32
      %930 = vsyncadd [#allocation6], %s929
      %s932 = sshll.u32 [#allocation7], 4
      %s933 = int_to_ptr.vmem [resolvable:$true] %s932
      %935 = dma.vmem_to_hbm [thread:$0]  %s933, 32, %s3, [#allocation6]
    $region29: #{tpu_custom_call.1} parent=1 // pred_fallthru
      _
    // Predicated region
    $region30: #{tpu_custom_call.1} parent=1 // pred_check
      _
    $region31: #{tpu_custom_call.1} parent=1 // pred_check_branch
      %937 = sbr.rel (0) target = $region33
    $region32: #{tpu_custom_call.1} parent=1 // pred_region
      %938 = dma.done [#allocation6], 32
    $region33: #{tpu_custom_call.1} parent=1 // pred_fallthru
      _
    %939 = vsyncpa [#allocation5], 1
    %940 = vsyncpa [#allocation6], 1

</llo_original>
